<compile_context>
chip_gen: v6e
topology: v6e:2x2x1
jax: 0.10.0
libtpu: 0.0.40
codegen_flags: <defaults>
</compile_context>

<pallas_src>
import jax
import jax.numpy as jnp
from jax.experimental import pallas as pl
from jax.experimental.pallas import tpu as pltpu

KH = KW = 3
EPS = 1e-5  # nn.BatchNorm2d default


# --------------------------------------------------------------------------
# Kernel 1: conv3x3 on a block of images (one MXU matmul), plus single-pass
# BN partial statistics.
# --------------------------------------------------------------------------
def conv_rows_kernel(x_ref, t_ref, y_ref, stats_ref):
    """
    x_ref    : (n_blk, H+2, W*Cin)    images, rows zero-padded by 1 top/bottom
    t_ref    : (KH*W*Cin, W*Cout)     flattened row-Toeplitz weight
                                      ('same' W-padding folded in)
    y_ref    : (n_blk, H, W*Cout)     conv output (lane-dense, W*Cout lanes)
    stats_ref: (1, 2, W*Cout)         per-step [sum, sum-of-squares] over rows
    """
    n_blk, H, wc_out = y_ref.shape
    wc_in = x_ref.shape[2]

    x = x_ref[...]
    # One im2col LHS per grid step: output row h of image i is
    # [x[i, h] | x[i, h+1] | x[i, h+2]]  (kh-major K order, matches t_ref).
    lhs = jnp.concatenate(
        [x[:, 0:H, :], x[:, 1:H + 1, :], x[:, 2:H + 2, :]],
        axis=-1,
    ).reshape(n_blk * H, KH * wc_in)

    # Single MXU push: M = n_blk*H, K = 3*W*Cin, N = W*Cout; f32 accumulation.
    acc = jnp.dot(lhs, t_ref[...], preferred_element_type=jnp.float32)

    y_ref[...] = acc.reshape(n_blk, H, wc_out).astype(y_ref.dtype)

    # Single-pass BN partial statistics (per (w, c) lane; reduced in wrapper).
    # Direct slot stores — no concatenate copy.
    stats_ref[0:1, 0:1, :] = jnp.sum(acc, axis=0).reshape(1, 1, wc_out)
    stats_ref[0:1, 1:2, :] = jnp.sum(acc * acc, axis=0).reshape(1, 1, wc_out)


# --------------------------------------------------------------------------
# Kernel 2: apply BN scale/shift + ELU on the flattened (N*H, W*Cout) slab.
# --------------------------------------------------------------------------
def bn_elu_kernel(y_ref, scale_ref, shift_ref, o_ref):
    """
    y_ref    : (r_blk, W*Cout)   conv-output row tile (f32 or bf16)
    scale_ref: (1, W*Cout)       gamma * rsqrt(var + eps), tiled over W   (f32)
    shift_ref: (1, W*Cout)       beta - mean * scale, tiled over W        (f32)
    o_ref    : (r_blk, W*Cout)
    """
    z = y_ref[...].astype(jnp.float32) * scale_ref[...] + shift_ref[...]
    # ELU(alpha=1). Clamp before exp so the discarded branch never produces
    # inf; exp sits on the EUP (free slot). Post-matmul math stays in f32.
    neg = jnp.exp(jnp.minimum(z, 0.0)) - 1.0
    o_ref[...] = jnp.where(z > 0, z, neg).astype(o_ref.dtype)


# --------------------------------------------------------------------------
# Row-Toeplitz weight: folds the kw taps AND the 'same' W-padding into a
# single (KH*W*Cin, W*Cout) matrix.  Built ONCE per weight update (outside the
# jitted forward) — for real W the gather/where/transpose here is comparable
# to the conv itself, so it must not run every forward.
# --------------------------------------------------------------------------
def build_row_toeplitz(weight, W):
    """weight: (Cout, Cin, KH, KW) torch layout -> (KH*W*Cin, W*Cout)."""
    Cout, Cin, kh_, kw_ = weight.shape
    wt = jnp.transpose(weight, (2, 3, 1, 0))              # (KH, KW, Cin, Cout)
    w_in = jnp.arange(W)[:, None]
    w_out = jnp.arange(W)[None, :]
    kw = w_in - w_out + (kw_ // 2)                         # kernel-column index
    valid = (kw >= 0) & (kw < kw_)                         # zero => 'same' W-pad
    kw_c = jnp.clip(kw, 0, kw_ - 1)
    t = wt[:, kw_c, :, :]                                  # (KH, W_in, W_out, Cin, Cout)
    t = jnp.where(valid[None, :, :, None, None], t, 0.0)
    t = jnp.transpose(t, (0, 1, 3, 2, 4))                  # (KH, W_in, Cin, W_out, Cout)
    return t.reshape(kh_ * W * Cin, W * Cout)


# --------------------------------------------------------------------------
# Forward wrapper (PyTorch-equivalent semantics, NCHW in / NCHW out).
# `bias` is accepted for interface parity but intentionally unused: a
# per-channel conv bias is exactly cancelled by training-mode BatchNorm.
# --------------------------------------------------------------------------
def conv_layer_forward(x_nchw, weight, bias, gamma, beta, *,
                       toeplitz=None, bf16_matmul=False):
    del bias  # exactly cancelled by training-mode BatchNorm
    N, Cin, H, W = x_nchw.shape
    Cout = weight.shape[0]
    WC_in, WC_out = W * Cin, W * Cout

    # NCHW -> (N, H+2, W*Cin). The transpose is forced by the NCHW interface;
    # XLA fuses pad + transpose + reshape into one copy (no extra HBM pass for
    # the H-padding, and no W-padding at all — it lives in the Toeplitz weight).
    x_rows = jnp.pad(jnp.transpose(x_nchw, (0, 2, 3, 1)),
                     ((0, 0), (1, 1), (0, 0), (0, 0))).reshape(N, H + 2, WC_in)

    t = toeplitz if toeplitz is not None else build_row_toeplitz(weight, W)

    conv_dtype = jnp.float32
    if bf16_matmul:
        # bf16 MXU operands (supported on v5e/v6e/v7x) + bf16 conv intermediate
        # (halves the HBM round-trip between the two kernels).  Stats are
        # computed on the f32 accumulator in-kernel; all BN/ELU math is f32.
        x_rows = x_rows.astype(jnp.bfloat16)
        t = t.astype(jnp.bfloat16)
        conv_dtype = jnp.bfloat16

    # ---- Kernel 1 grid: batch images per step so the MXU sees M >= ~128 rows.
    target = max(1, pl.cdiv(128, H))           # images per step to reach M~128
    n_blk = 1
    for d in range(1, min(N, target) + 1):     # largest divisor of N <= target
        if N % d == 0:
            n_blk = d
    n_steps = N // n_blk

    conv_out, stats = pl.pallas_call(
        conv_rows_kernel,
        out_shape=(jax.ShapeDtypeStruct((N, H, WC_out), conv_dtype),
                   jax.ShapeDtypeStruct((n_steps, 2, WC_out), jnp.float32)),
        grid=(n_steps,),
        in_specs=[pl.BlockSpec((n_blk, H + 2, WC_in), lambda n: (n, 0, 0)),
                  pl.BlockSpec((KH * WC_in, WC_out), lambda n: (0, 0))],
        out_specs=(pl.BlockSpec((n_blk, H, WC_out), lambda n: (n, 0, 0)),
                   pl.BlockSpec((1, 2, WC_out), lambda n: (n, 0, 0))),
        compiler_params=pltpu.CompilerParams(
            dimension_semantics=("parallel",),          # megacore on v7x
            vmem_limit_bytes=64 * 1024 * 1024),         # v5e scoped default is 16 MiB
    )(x_rows, t)

    # Tiny global reduction (n_steps * 2 * W * Cout scalars) -> BN scale/shift.
    s = stats.reshape(n_steps, 2, W, Cout).sum(axis=(0, 2))   # (2, Cout)
    count = N * H * W
    mean = s[0] / count
    var = s[1] / count - mean * mean                          # biased, train-mode BN
    scale = gamma * jax.lax.rsqrt(var + EPS)
    shift = beta - mean * scale
    scale_t = jnp.tile(scale, W).reshape(1, WC_out)           # lane layout w*Cout + c
    shift_t = jnp.tile(shift, W).reshape(1, WC_out)

    # ---- Kernel 2: flatten to (N*H, W*Cout) and use big row tiles (<=512).
    R = N * H
    conv_flat = conv_out.reshape(R, WC_out)
    r_blk = R
    for cand in (512, 256, 128, 64, 32, 16, 8):
        if cand <= R and R % cand == 0:
            r_blk = cand
            break

    # Reuse the conv intermediate's HBM buffer for the activation when dtypes
    # match (no second activation-sized allocation).
    alias = {0: 0} if conv_dtype == x_nchw.dtype else {}

    out_flat = pl.pallas_call(
        bn_elu_kernel,
        out_shape=jax.ShapeDtypeStruct((R, WC_out), x_nchw.dtype),
        grid=(R // r_blk,),
        in_specs=[pl.BlockSpec((r_blk, WC_out), lambda r: (r, 0)),
                  pl.BlockSpec((1, WC_out), lambda r: (0, 0)),
                  pl.BlockSpec((1, WC_out), lambda r: (0, 0))],
        out_specs=pl.BlockSpec((r_blk, WC_out), lambda r: (r, 0)),
        input_output_aliases=alias,
        compiler_params=pltpu.CompilerParams(
            dimension_semantics=("parallel",)),
    )(conv_flat, scale_t, shift_t)

    # Back to the module's NCHW interface.
    return jnp.transpose(out_flat.reshape(N, H, W, Cout), (0, 3, 1, 2))


# --------------------------------------------------------------------------
# Plain-JAX reference (same semantics as the PyTorch module in training mode).
# --------------------------------------------------------------------------
def _reference(x_nchw, weight, bias, gamma, beta):
    y = jax.lax.conv_general_dilated(
        x_nchw, weight, window_strides=(1, 1), padding="SAME",
        dimension_numbers=("NCHW", "OIHW", "NCHW"),
    ) + bias[None, :, None, None]
    mean = jnp.mean(y, axis=(0, 2, 3), keepdims=True)
    var = jnp.mean((y - mean) ** 2, axis=(0, 2, 3), keepdims=True)
    y = (y - mean) * jax.lax.rsqrt(var + EPS)
    y = y * gamma[None, :, None, None] + beta[None, :, None, None]
    return jnp.where(y > 0, y, jnp.exp(jnp.minimum(y, 0.0)) - 1.0)


if __name__ == "__main__":
    key = jax.random.PRNGKey(0)
    k_x, k_w, k_b, k_g, k_bt = jax.random.split(key, 5)

    N, Cin, Cout, H, W = 2, 4, 8, 16, 16

    x = jax.random.normal(k_x, (N, Cin, H, W), dtype=jnp.float32)
    weight = jax.random.normal(k_w, (Cout, Cin, KH, KW), dtype=jnp.float32) * 0.1
    bias = jax.random.normal(k_b, (Cout,), dtype=jnp.float32) * 0.1
    gamma = 1.0 + 0.1 * jax.random.normal(k_g, (Cout,), dtype=jnp.float32)
    beta = 0.1 * jax.random.normal(k_bt, (Cout,), dtype=jnp.float32)

    # Toeplitz RHS built once per weight update, hoisted out of the forward.
    t_flat = build_row_toeplitz(weight, W)

    fwd = jax.jit(conv_layer_forward, static_argnames=("bf16_matmul",))

    # f32 path (tight tolerance against the f32 reference).
    out = jax.block_until_ready(fwd(x, weight, bias, gamma, beta, toeplitz=t_flat))
    ref = _reference(x, weight, bias, gamma, beta)
    assert out.shape == (N, Cout, H, W)
    assert jnp.allclose(out, ref, atol=1e-3, rtol=1e-3), \
        float(jnp.max(jnp.abs(out - ref)))

    # bf16-MXU path (recommended default on v6e/v7x): looser tolerance since the
    # conv intermediate and MXU operands are bf16.
    out_bf16 = jax.block_until_ready(
        fwd(x, weight, bias, gamma, beta, toeplitz=t_flat, bf16_matmul=True))
    assert jnp.allclose(out_bf16, ref, atol=5e-2, rtol=5e-2), \
        float(jnp.max(jnp.abs(out_bf16 - ref)))

    print("KERNEL_OK")
</pallas_src>

<mosaic_0001>
module attributes {stable_mosaic.version = 11 : i64} {
  func.func @conv_rows_kernel(%arg0: i32, %arg1: memref<2x18x64xf32, #tpu.memory_space<vmem>>, %arg2: memref<192x128xf32, #tpu.memory_space<vmem>>, %arg3: memref<2x16x128xf32, #tpu.memory_space<vmem>>, %arg4: memref<1x2x128xf32, #tpu.memory_space<vmem>>) attributes {dimension_semantics = [#tpu.dimension_semantics<parallel>], iteration_bounds = array<i64: 1>, scalar_prefetch = 0 : i64, scratch_operands = 0 : i64, tpu.core_type = #tpu.core_type<tc>, window_params = [{transform_indices = @transform_0, window_bounds = array<i64: 2, 18, 64>}, {pipeline_mode = #tpu.pipeline_mode<synchronous>, transform_indices = @transform_1, window_bounds = array<i64: 192, 128>}, {transform_indices = @transform_2, window_bounds = array<i64: 2, 16, 128>}, {transform_indices = @transform_3, window_bounds = array<i64: 1, 2, 128>}]} {
    %c0 = arith.constant 0 : index
    %c0_0 = arith.constant 0 : index
    %c0_1 = arith.constant 0 : index
    %0 = vector.load %arg1[%c0, %c0_0, %c0_1] : memref<2x18x64xf32, #tpu.memory_space<vmem>>, vector<2x18x64xf32>
    %1 = vector.extract_strided_slice %0 {offsets = [0, 0, 0], sizes = [2, 16, 64], strides = [1, 1, 1]} : vector<2x18x64xf32> to vector<2x16x64xf32>
    %2 = vector.extract_strided_slice %0 {offsets = [0, 1, 0], sizes = [2, 16, 64], strides = [1, 1, 1]} : vector<2x18x64xf32> to vector<2x16x64xf32>
    %3 = vector.extract_strided_slice %0 {offsets = [0, 2, 0], sizes = [2, 16, 64], strides = [1, 1, 1]} : vector<2x18x64xf32> to vector<2x16x64xf32>
    %4 = tpu.concatenate %1, %2, %3 in 2 : vector<2x16x64xf32>, vector<2x16x64xf32>, vector<2x16x64xf32> -> vector<2x16x192xf32>
    %5 = vector.shape_cast %4 : vector<2x16x192xf32> to vector<32x192xf32>
    %c0_2 = arith.constant 0 : index
    %c0_3 = arith.constant 0 : index
    %6 = vector.load %arg2[%c0_2, %c0_3] : memref<192x128xf32, #tpu.memory_space<vmem>>, vector<192x128xf32>
    %cst = arith.constant dense<0.000000e+00> : vector<32x128xf32>
    %7 = tpu.matmul %5, %6, %cst {dimension_numbers = #tpu.dot_dimension_numbers<[1], [0], [0], [1], [0, 0, 1, 1], [], []>} : vector<32x192xf32>, vector<192x128xf32>, vector<32x128xf32> -> vector<32x128xf32>
    %8 = vector.shape_cast %7 : vector<32x128xf32> to vector<2x16x128xf32>
    %c0_4 = arith.constant 0 : index
    %c0_5 = arith.constant 0 : index
    %c0_6 = arith.constant 0 : index
    %9 = vector.load %arg3[%c0_4, %c0_5, %c0_6] : memref<2x16x128xf32, #tpu.memory_space<vmem>>, vector<2x16x128xf32>
    tpu.vector_store %arg3[%c0_4, %c0_5, %c0_6], %8 {strides = array<i32>} : memref<2x16x128xf32, #tpu.memory_space<vmem>>, vector<2x16x128xf32>,
    %cst_7 = arith.constant dense<0.000000e+00> : vector<128xf32>
    %10 = vector.multi_reduction <add>, %7, %cst_7 [0] : vector<32x128xf32> to vector<128xf32>
    %11 = vector.shape_cast %10 : vector<128xf32> to vector<1x1x128xf32>
    %c0_8 = arith.constant 0 : index
    %c0_9 = arith.constant 0 : index
    %c0_10 = arith.constant 0 : index
    %12 = vector.load %arg4[%c0_8, %c0_9, %c0_10] : memref<1x2x128xf32, #tpu.memory_space<vmem>>, vector<1x1x128xf32>
    tpu.vector_store %arg4[%c0_8, %c0_9, %c0_10], %11 {strides = array<i32>} : memref<1x2x128xf32, #tpu.memory_space<vmem>>, vector<1x1x128xf32>,
    %13 = arith.mulf %7, %7 : vector<32x128xf32>
    %cst_11 = arith.constant dense<0.000000e+00> : vector<128xf32>
    %14 = vector.multi_reduction <add>, %13, %cst_11 [0] : vector<32x128xf32> to vector<128xf32>
    %15 = vector.shape_cast %14 : vector<128xf32> to vector<1x1x128xf32>
    %c0_12 = arith.constant 0 : index
    %c1 = arith.constant 1 : index
    %c0_13 = arith.constant 0 : index
    %16 = vector.load %arg4[%c0_12, %c1, %c0_13] : memref<1x2x128xf32, #tpu.memory_space<vmem>>, vector<1x1x128xf32>
    tpu.vector_store %arg4[%c0_12, %c1, %c0_13], %15 {strides = array<i32>} : memref<1x2x128xf32, #tpu.memory_space<vmem>>, vector<1x1x128xf32>,
    return
  }
  func.func @transform_0(%arg0: i32) -> (i32, i32, i32) {
    %c0_i32 = arith.constant 0 : i32
    %c0_i32_0 = arith.constant 0 : i32
    %c0_i32_1 = arith.constant 0 : i32
    return %arg0, %c0_i32, %c0_i32_0 : i32, i32, i32
  }
  func.func @transform_1(%arg0: i32) -> (i32, i32) {
    %c0_i32 = arith.constant 0 : i32
    %c0_i32_0 = arith.constant 0 : i32
    %c0_i32_1 = arith.constant 0 : i32
    return %c0_i32, %c0_i32_0 : i32, i32
  }
  func.func @transform_2(%arg0: i32) -> (i32, i32, i32) {
    %c0_i32 = arith.constant 0 : i32
    %c0_i32_0 = arith.constant 0 : i32
    %c0_i32_1 = arith.constant 0 : i32
    return %arg0, %c0_i32, %c0_i32_0 : i32, i32, i32
  }
  func.func @transform_3(%arg0: i32) -> (i32, i32, i32) {
    %c0_i32 = arith.constant 0 : i32
    %c0_i32_0 = arith.constant 0 : i32
    %c0_i32_1 = arith.constant 0 : i32
    return %arg0, %c0_i32, %c0_i32_0 : i32, i32, i32
  }
}

module attributes {stable_mosaic.version = 11 : i64} {
  func.func @bn_elu_kernel(%arg0: i32, %arg1: memref<32x128xf32, #tpu.memory_space<vmem>>, %arg2: memref<1x128xf32, #tpu.memory_space<vmem>>, %arg3: memref<1x128xf32, #tpu.memory_space<vmem>>, %arg4: memref<32x128xf32, #tpu.memory_space<vmem>>) attributes {dimension_semantics = [#tpu.dimension_semantics<parallel>], iteration_bounds = array<i64: 1>, scalar_prefetch = 0 : i64, scratch_operands = 0 : i64, tpu.core_type = #tpu.core_type<tc>, window_params = [{transform_indices = @transform_0, window_bounds = array<i64: 32, 128>}, {pipeline_mode = #tpu.pipeline_mode<synchronous>, transform_indices = @transform_1, window_bounds = array<i64: 1, 128>}, {pipeline_mode = #tpu.pipeline_mode<synchronous>, transform_indices = @transform_2, window_bounds = array<i64: 1, 128>}, {transform_indices = @transform_3, window_bounds = array<i64: 32, 128>}]} {
    %c0 = arith.constant 0 : index
    %c0_0 = arith.constant 0 : index
    %0 = vector.load %arg1[%c0, %c0_0] : memref<32x128xf32, #tpu.memory_space<vmem>>, vector<32x128xf32>
    %c0_1 = arith.constant 0 : index
    %c0_2 = arith.constant 0 : index
    %1 = vector.load %arg2[%c0_1, %c0_2] : memref<1x128xf32, #tpu.memory_space<vmem>>, vector<1x128xf32>
    %2 = vector.broadcast %1 : vector<1x128xf32> to vector<32x128xf32>
    %3 = arith.mulf %0, %2 : vector<32x128xf32>
    %c0_3 = arith.constant 0 : index
    %c0_4 = arith.constant 0 : index
    %4 = vector.load %arg3[%c0_3, %c0_4] : memref<1x128xf32, #tpu.memory_space<vmem>>, vector<1x128xf32>
    %5 = vector.broadcast %4 : vector<1x128xf32> to vector<32x128xf32>
    %6 = arith.addf %3, %5 : vector<32x128xf32>
    %cst = arith.constant 0.000000e+00 : f32
    %7 = vector.broadcast %cst : f32 to vector<32x128xf32>
    %8 = arith.minimumf %6, %7 : vector<32x128xf32>
    %9 = math.exp %8 : vector<32x128xf32>
    %cst_5 = arith.constant 1.000000e+00 : f32
    %10 = vector.broadcast %cst_5 : f32 to vector<32x128xf32>
    %11 = arith.subf %9, %10 : vector<32x128xf32>
    %cst_6 = arith.constant 0.000000e+00 : f32
    %12 = vector.broadcast %cst_6 : f32 to vector<32x128xf32>
    %13 = arith.cmpf ogt, %6, %12 : vector<32x128xf32>
    %14 = arith.select %13, %6, %11 : vector<32x128xi1>, vector<32x128xf32>
    %c0_7 = arith.constant 0 : index
    %c0_8 = arith.constant 0 : index
    %15 = vector.load %arg4[%c0_7, %c0_8] : memref<32x128xf32, #tpu.memory_space<vmem>>, vector<32x128xf32>
    tpu.vector_store %arg4[%c0_7, %c0_8], %14 {strides = array<i32>} : memref<32x128xf32, #tpu.memory_space<vmem>>, vector<32x128xf32>,
    return
  }
  func.func @transform_0(%arg0: i32) -> (i32, i32) {
    %c0_i32 = arith.constant 0 : i32
    %c0_i32_0 = arith.constant 0 : i32
    return %arg0, %c0_i32 : i32, i32
  }
  func.func @transform_1(%arg0: i32) -> (i32, i32) {
    %c0_i32 = arith.constant 0 : i32
    %c0_i32_0 = arith.constant 0 : i32
    %c0_i32_1 = arith.constant 0 : i32
    return %c0_i32, %c0_i32_0 : i32, i32
  }
  func.func @transform_2(%arg0: i32) -> (i32, i32) {
    %c0_i32 = arith.constant 0 : i32
    %c0_i32_0 = arith.constant 0 : i32
    %c0_i32_1 = arith.constant 0 : i32
    return %c0_i32, %c0_i32_0 : i32, i32
  }
  func.func @transform_3(%arg0: i32) -> (i32, i32) {
    %c0_i32 = arith.constant 0 : i32
    %c0_i32_0 = arith.constant 0 : i32
    return %arg0, %c0_i32 : i32, i32
  }
}

</mosaic_0001>

<llo_original>
// kernel: tile.18
$region0: #{tile.18}
  #allocation0 [shape = 's32[1]{0}', space=sflag, size = 0x4, scoped, tag = 'scoped memory for tile.18']
  %s0 = inlined_call_operand.vmem [shape: f32[8], index: 0, kind: input, shape index: {}]
  %s1 = inlined_call_operand.vmem [shape: f32[16,8], index: 1, kind: output, shape index: {}]
  // Predicated region
  $region2: #{tile.18} parent=0 // pred_check
    _
  $region3: #{tile.18} parent=0 // pred_check_branch
    %3 = sbr.rel (0) target = $region5
  $region4: #{tile.18} parent=0 // pred_region
    _
  $region5: #{tile.18} parent=0 // pred_fallthru
    _
  %v4 = vld [vmem:[%s0] ss:$0 sm:$0xff]
  %5 = vst [vmem:[%s1] sm:$0xff] %v4
  %s6 = scalar_lea.vmem %s1, 8
  %7 = vst [vmem:[%s6] sm:$0xff] %v4

// kernel: tile.19
$region0: #{tile.19}
  %s0 = inlined_call_operand.vmem [shape: f32[16,8], index: 0, kind: input, shape index: {}]
  %s1 = inlined_call_operand.vmem [shape: f32[1,128], index: 1, kind: output, shape index: {}]
  $region1: #{tile.19} parent=0
    #allocation0 [shape = 'u8[4096]{0}', space=vmem, size = 0x1000, scoped, tag = 'scoped mem for output reshape']
    %v2 = vld [vmem:[%s0] sm:$0x1]
    %vm3 = vcmask 64512
    %4 = vst.msk [vmem:[#allocation0] sm:$0x1] %vm3, %v2
    %s5 = scalar_lea.vmem %s0, 15
    %v6 = vld [vmem:[%s5] sm:$0x1]
    %7 = vrot.lane.b32.xlu0 %v6, 120
    %v8 = vpop.permute.xlu0 %7
    %vm9 = vcmask 1048512
    %10 = vst.msk [vmem:[#allocation0] sm:$0x1] %vm9, %v8
    %s11 = scalar_lea.vmem %s0, 14
    %v12 = vld [vmem:[%s11] sm:$0x1]
    %13 = vrot.lane.b32.xlu0 %v12, 112
    %v14 = vpop.permute.xlu0 %13
    %vm15 = vcmask 982912
    %16 = vst.msk [vmem:[#allocation0] sm:$0x1] %vm15, %v14
    %s17 = scalar_lea.vmem %s0, 13
    %v18 = vld [vmem:[%s17] sm:$0x1]
    %19 = vrot.lane.b32.xlu0 %v18, 104
    %v20 = vpop.permute.xlu0 %19
    %vm21 = vcmask 917312
    %22 = vst.msk [vmem:[#allocation0] sm:$0x1] %vm21, %v20
    %s23 = scalar_lea.vmem %s0, 12
    %v24 = vld [vmem:[%s23] sm:$0x1]
    %25 = vrot.lane.b32.xlu0 %v24, 96
    %v26 = vpop.permute.xlu0 %25
    %vm27 = vcmask 851712
    %28 = vst.msk [vmem:[#allocation0] sm:$0x1] %vm27, %v26
    %s29 = scalar_lea.vmem %s0, 11
    %v30 = vld [vmem:[%s29] sm:$0x1]
    %31 = vrot.lane.b32.xlu0 %v30, 88
    %v32 = vpop.permute.xlu0 %31
    %vm33 = vcmask 786112
    %34 = vst.msk [vmem:[#allocation0] sm:$0x1] %vm33, %v32
    %s35 = scalar_lea.vmem %s0, 10
    %v36 = vld [vmem:[%s35] sm:$0x1]
    %37 = vrot.lane.b32.xlu0 %v36, 80
    %v38 = vpop.permute.xlu0 %37
    %vm39 = vcmask 720512
    %40 = vst.msk [vmem:[#allocation0] sm:$0x1] %vm39, %v38
    %s41 = scalar_lea.vmem %s0, 9
    %v42 = vld [vmem:[%s41] sm:$0x1]
    %43 = vrot.lane.b32.xlu0 %v42, 72
    %v44 = vpop.permute.xlu0 %43
    %vm45 = vcmask 654912
    %46 = vst.msk [vmem:[#allocation0] sm:$0x1] %vm45, %v44
    %s47 = scalar_lea.vmem %s0, 8
    %v48 = vld [vmem:[%s47] sm:$0x1]
    %49 = vrot.lane.b32.xlu0 %v48, 64
    %v50 = vpop.permute.xlu0 %49
    %vm51 = vcmask 589312
    %52 = vst.msk [vmem:[#allocation0] sm:$0x1] %vm51, %v50
    %s53 = scalar_lea.vmem %s0, 7
    %v54 = vld [vmem:[%s53] sm:$0x1]
    %55 = vrot.lane.b32.xlu0 %v54, 56
    %v56 = vpop.permute.xlu0 %55
    %vm57 = vcmask 523712
    %58 = vst.msk [vmem:[#allocation0] sm:$0x1] %vm57, %v56
    %s59 = scalar_lea.vmem %s0, 6
    %v60 = vld [vmem:[%s59] sm:$0x1]
    %61 = vrot.lane.b32.xlu0 %v60, 48
    %v62 = vpop.permute.xlu0 %61
    %vm63 = vcmask 458112
    %64 = vst.msk [vmem:[#allocation0] sm:$0x1] %vm63, %v62
    %s65 = scalar_lea.vmem %s0, 5
    %v66 = vld [vmem:[%s65] sm:$0x1]
    %67 = vrot.lane.b32.xlu0 %v66, 40
    %v68 = vpop.permute.xlu0 %67
    %vm69 = vcmask 392512
    %70 = vst.msk [vmem:[#allocation0] sm:$0x1] %vm69, %v68
    %s71 = scalar_lea.vmem %s0, 4
    %v72 = vld [vmem:[%s71] sm:$0x1]
    %73 = vrot.lane.b32.xlu0 %v72, 32
    %v74 = vpop.permute.xlu0 %73
    %vm75 = vcmask 326912
    %76 = vst.msk [vmem:[#allocation0] sm:$0x1] %vm75, %v74
    %s77 = scalar_lea.vmem %s0, 3
    %v78 = vld [vmem:[%s77] sm:$0x1]
    %79 = vrot.lane.b32.xlu0 %v78, 24
    %v80 = vpop.permute.xlu0 %79
    %vm81 = vcmask 261312
    %82 = vst.msk [vmem:[#allocation0] sm:$0x1] %vm81, %v80
    %s83 = scalar_lea.vmem %s0, 2
    %v84 = vld [vmem:[%s83] sm:$0x1]
    %85 = vrot.lane.b32.xlu0 %v84, 16
    %v86 = vpop.permute.xlu0 %85
    %vm87 = vcmask 195712
    %88 = vst.msk [vmem:[#allocation0] sm:$0x1] %vm87, %v86
    %s89 = scalar_lea.vmem %s0, 1
    %v90 = vld [vmem:[%s89] sm:$0x1]
    %91 = vrot.lane.b32.xlu0 %v90, 8
    %v92 = vpop.permute.xlu0 %91
    %vm93 = vcmask 130112
    %94 = vst.msk [vmem:[#allocation0] sm:$0x1] %vm93, %v92
    %s96 = sshll.u32 1, 1
    %s97 = ssub.s32 %s96, 1
    %v99 = vld [vmem:[#allocation0] sm:%s97]
    %s100 = sshll.u32 1, 1
    %s101 = ssub.s32 %s100, 1
    %102 = vst [vmem:[%s1] sm:%s101] %v99

// kernel: conv_layer_forward.2
$region0: #{conv_layer_forward.2}
  #allocation0 [shape = 'u32[]', space=smem, size = 0x4, offset = 0x4, fixed_abs, tag = 'smem constant byte address 0x4 - core index']
  #allocation1 [shape = 'u32[144,128]{1,0:T(1,128)}', space=vmem, size = 0x12000, scoped, tag = 'internal scratch']
  %s0 = inlined_call_operand.vmem [shape: f32[2,18,64], index: 0, kind: input, shape index: {}]
  %s1 = inlined_call_operand.vmem [shape: f32[192,128], index: 1, kind: input, shape index: {}]
  %s2 = inlined_call_operand.vmem [shape: f32[2,16,128], index: 2, kind: output, shape index: {0}]
  %s3 = inlined_call_operand.vmem [shape: f32[1,2,128], index: 3, kind: output, shape index: {1}]
  %4 = xla_tuple %s2, %s3
  %s5 = sld [smem:[#allocation0]]
  $region26: #{conv_layer_forward.2} parent=0
    _
  %s7 = ssub.s32 1, %s5
  %s8 = scalar_select 0, %s7, %s5
  // Predicated region
  $region2: #{conv_layer_forward.2} parent=0 // pred_check
    _
  $region3: #{conv_layer_forward.2} parent=0 // pred_check_branch
    %10 = sbr.rel (0) target = $region5
  $region4: #{conv_layer_forward.2} parent=0 // pred_region
    _
  $region5: #{conv_layer_forward.2} parent=0 // pred_fallthru
    _
  // Predicated region
  $region6: #{conv_layer_forward.2} parent=0 // pred_check
    _
  $region7: #{conv_layer_forward.2} parent=0 // pred_check_branch
    %12 = sbr.rel (0) target = $region9
  $region8: #{conv_layer_forward.2} parent=0 // pred_region
    _
  $region9: #{conv_layer_forward.2} parent=0 // pred_fallthru
    _
  %v13 = vld [vmem:[%s0] sm:$0xff]
  %v14 = vld [vmem:[%s0 + $0x8] sm:$0xff]
  %v15 = vld [vmem:[%s0 + $0x10] sm:$0x3]
  %v16 = vld [vmem:[%s0 + $0x18] sm:$0xff]
  %v17 = vld [vmem:[%s0 + $0x20] sm:$0xff]
  %v18 = vld [vmem:[%s0 + $0x28] sm:$0x3]
  %vm25 = vcmask 1046528
  %v26 = vrot.slane %v13, 1
  %v27 = vrot.slane %v14, 1
  %v28 = vsel %vm25, %v26, %v27
  %v29 = vrot.slane %v15, 1
  %v30 = vsel %vm25, %v27, %v29
  %v31 = vrot.slane %v16, 1
  %v32 = vrot.slane %v17, 1
  %v33 = vsel %vm25, %v31, %v32
  %v34 = vrot.slane %v18, 1
  %v35 = vsel %vm25, %v32, %v34
  %36 = vrot.lane.b32.xlu0 %v28, 64
  %v37 = vpop.permute.xlu0 %36
  %38 = vrot.lane.b32.xlu0 %v30, 64
  %v39 = vpop.permute.xlu0 %38
  %40 = vrot.lane.b32.xlu0 %v33, 64
  %v41 = vpop.permute.xlu0 %40
  %42 = vrot.lane.b32.xlu0 %v35, 64
  %v43 = vpop.permute.xlu0 %42
  %vm48 = vcmask 1045504
  %v49 = vrot.slane %v13, 2
  %v50 = vrot.slane %v14, 2
  %v51 = vsel %vm48, %v49, %v50
  %v52 = vrot.slane %v15, 2
  %v53 = vsel %vm48, %v50, %v52
  %v54 = vrot.slane %v16, 2
  %v55 = vrot.slane %v17, 2
  %v56 = vsel %vm48, %v54, %v55
  %v57 = vrot.slane %v18, 2
  %v58 = vsel %vm48, %v55, %v57
  %vm59 = vcmask 523264
  %v60 = vsel %vm59, %v13, %v37
  %v61 = vsel %vm59, %v14, %v39
  %v62 = vsel %vm59, %v16, %v41
  %v63 = vsel %vm59, %v17, %v43
  %v64 = vld [vmem:[%s1] sm:$0xff]
  %v65 = vld [vmem:[%s1 + $0x8] sm:$0xff]
  %v66 = vld [vmem:[%s1 + $0x10] sm:$0xff]
  %v67 = vld [vmem:[%s1 + $0x18] sm:$0xff]
  %v68 = vld [vmem:[%s1 + $0x20] sm:$0xff]
  %v69 = vld [vmem:[%s1 + $0x28] sm:$0xff]
  %v70 = vld [vmem:[%s1 + $0x30] sm:$0xff]
  %v71 = vld [vmem:[%s1 + $0x38] sm:$0xff]
  %v72 = vld [vmem:[%s1 + $0x40] sm:$0xff]
  %v73 = vld [vmem:[%s1 + $0x48] sm:$0xff]
  %v74 = vld [vmem:[%s1 + $0x50] sm:$0xff]
  %v75 = vld [vmem:[%s1 + $0x58] sm:$0xff]
  %v76 = vld [vmem:[%s1 + $0x60] sm:$0xff]
  %v77 = vld [vmem:[%s1 + $0x68] sm:$0xff]
  %v78 = vld [vmem:[%s1 + $0x70] sm:$0xff]
  %v79 = vld [vmem:[%s1 + $0x78] sm:$0xff]
  %v80 = vld [vmem:[%s1 + $0x80] sm:$0xff]
  %v81 = vld [vmem:[%s1 + $0x88] sm:$0xff]
  %v82 = vld [vmem:[%s1 + $0x90] sm:$0xff]
  %v83 = vld [vmem:[%s1 + $0x98] sm:$0xff]
  %v84 = vld [vmem:[%s1 + $0xa0] sm:$0xff]
  %v85 = vld [vmem:[%s1 + $0xa8] sm:$0xff]
  %v86 = vld [vmem:[%s1 + $0xb0] sm:$0xff]
  %v87 = vld [vmem:[%s1 + $0xb8] sm:$0xff]
  %v88 = vsel %vm59, %v51, 0
  %v90 = vsel %vm59, %v53, 0
  %v92 = vsel %vm59, %v56, 0
  %v94 = vsel %vm59, %v58, 0
  %96 = vmatprep.subr.mxu0 0.0
  %97 = vmatpush1.msra.mxu0 %v79
  %98 = vmatprep.subr.mxu0 0.0
  %99 = vmatpush1.msra.mxu0 %v78
  %100 = vmatprep.subr.mxu0 0.0
  %101 = vmatpush1.msra.mxu0 %v77
  %102 = vmatprep.subr.mxu0 0.0
  %103 = vmatpush1.msra.mxu0 %v76
  %104 = vmatprep.subr.mxu0 0.0
  %105 = vmatpush1.msra.mxu0 %v75
  %106 = vmatprep.subr.mxu0 0.0
  %107 = vmatpush1.msra.mxu0 %v74
  %108 = vmatprep.subr.mxu0 0.0
  %109 = vmatpush1.msra.mxu0 %v73
  %110 = vmatprep.subr.mxu0 0.0
  %111 = vmatpush1.msra.mxu0 %v72
  %112 = vmatprep.subr.mxu0 0.0
  %113 = vmatpush1.msra.mxu0 %v71
  %114 = vmatprep.subr.mxu0 0.0
  %115 = vmatpush1.msra.mxu0 %v70
  %116 = vmatprep.subr.mxu0 0.0
  %117 = vmatpush1.msra.mxu0 %v69
  %118 = vmatprep.subr.mxu0 0.0
  %119 = vmatpush1.msra.mxu0 %v68
  %120 = vmatprep.subr.mxu0 0.0
  %121 = vmatpush1.msra.mxu0 %v67
  %122 = vmatprep.subr.mxu0 0.0
  %123 = vmatpush1.msra.mxu0 %v66
  %124 = vmatprep.subr.mxu0 0.0
  %125 = vmatpush1.msra.mxu0 %v65
  %126 = vmatprep.subr.mxu0 0.0
  %127 = vmatpush1.msra.mxu0 %v64
  %128 = vmatprep.subr.mxu0 0.0
  %129 = vmatpush2.msra.mxu0 0.0
  %130 = vmatprep.subr.mxu0 0.0
  %131 = vmatpush2.msra.mxu0 0.0
  %132 = vmatprep.subr.mxu0 0.0
  %133 = vmatpush2.msra.mxu0 0.0
  %134 = vmatprep.subr.mxu0 0.0
  %135 = vmatpush2.msra.mxu0 0.0
  %136 = vmatprep.subr.mxu0 0.0
  %137 = vmatpush2.msra.mxu0 0.0
  %138 = vmatprep.subr.mxu0 0.0
  %139 = vmatpush2.msra.mxu0 0.0
  %140 = vmatprep.subr.mxu0 0.0
  %141 = vmatpush2.msra.mxu0 0.0
  %142 = vmatprep.subr.mxu0 0.0
  %143 = vmatpush2.msra.mxu0 0.0
  %144 = vmatprep.subr.mxu0 0.0
  %145 = vmatpush2.msra.mxu0 %v87
  %146 = vmatprep.subr.mxu0 0.0
  %147 = vmatpush2.msra.mxu0 %v86
  %148 = vmatprep.subr.mxu0 0.0
  %149 = vmatpush2.msra.mxu0 %v85
  %150 = vmatprep.subr.mxu0 0.0
  %151 = vmatpush2.msra.mxu0 %v84
  %152 = vmatprep.subr.mxu0 0.0
  %153 = vmatpush2.msra.mxu0 %v83
  %154 = vmatprep.subr.mxu0 0.0
  %155 = vmatpush2.msra.mxu0 %v82
  %156 = vmatprep.subr.mxu0 0.0
  %157 = vmatpush2.msra.mxu0 %v81
  %158 = vmatprep.subr.mxu0 0.0
  %159 = vmatpush2.msra.mxu0 %v80
  %160 = vmatprep.mubr.f32.mxu0 %v88
  %161 = vmatmul.mubr.f32.gmra.mxu0 %v60
  %v162 = vpop.f32.mrf.mxu0
  %v163 = vadd.f32 0.0, %v162
  %v164 = vpop.f32.mrf.mxu0
  %165 = vmatprep.mubr.f32.mxu0 %v90
  %166 = vmatmul.mubr.f32.gmra.mxu0 %v61
  %v167 = vpop.f32.mrf.mxu0
  %v168 = vadd.f32 0.0, %v167
  %v169 = vpop.f32.mrf.mxu0
  %170 = vmatprep.mubr.f32.mxu0 %v92
  %171 = vmatmul.mubr.f32.gmra.mxu0 %v62
  %v172 = vpop.f32.mrf.mxu0
  %v173 = vadd.f32 0.0, %v172
  %v174 = vpop.f32.mrf.mxu0
  %175 = vmatprep.mubr.f32.mxu0 %v94
  %176 = vmatmul.mubr.f32.gmra.mxu0 %v63
  %v177 = vpop.f32.mrf.mxu0
  %v178 = vadd.f32 0.0, %v177
  %v179 = vpop.f32.mrf.mxu0
  %180 = vdwg.mxu0
  %181 = vst [vmem:[%s2] sm:$0xff] %v163
  %182 = vst [vmem:[%s2 + $0x8] sm:$0xff] %v168
  %183 = vst [vmem:[%s2 + $0x10] sm:$0xff] %v173
  %184 = vst [vmem:[%s2 + $0x18] sm:$0xff] %v178
  %v185 = vadd.f32 %v163, %v168
  %v186 = vadd.f32 %v185, %v173
  %v187 = vadd.f32 %v186, %v178
  %v188 = vrot.slane %v187, 4
  %v189 = vadd.f32 %v187, %v188
  %v190 = vrot.slane %v189, 2
  %v191 = vadd.f32 %v189, %v190
  %v192 = vrot.slane %v191, 1
  %v193 = vadd.f32 %v191, %v192
  %194 = vst [vmem:[%s3] sm:$0x1] %v193
  %v195 = vmul.f32 %v163, %v163
  %v196 = vmul.f32 %v168, %v168
  %v197 = vmul.f32 %v173, %v173
  %v198 = vmul.f32 %v178, %v178
  %v199 = vadd.f32 %v195, %v196
  %v200 = vadd.f32 %v199, %v197
  %v201 = vadd.f32 %v200, %v198
  %v202 = vrot.slane %v201, 4
  %v203 = vadd.f32 %v201, %v202
  %v204 = vrot.slane %v203, 2
  %v205 = vadd.f32 %v203, %v204
  %v206 = vrot.slane %v205, 1
  %v207 = vadd.f32 %v205, %v206
  %208 = vst [vmem:[%s3 + $0x1] sm:$0x1] %v207
  // Predicated region
  $region10: #{conv_layer_forward.2} parent=0 // pred_check
    _
  $region11: #{conv_layer_forward.2} parent=0 // pred_check_branch
    %210 = sbr.rel (0) target = $region13
  $region12: #{conv_layer_forward.2} parent=0 // pred_region
    _
  $region13: #{conv_layer_forward.2} parent=0 // pred_fallthru
    _
  // Predicated region
  $region14: #{conv_layer_forward.2} parent=0 // pred_check
    _
  $region15: #{conv_layer_forward.2} parent=0 // pred_check_branch
    %212 = sbr.rel (0) target = $region17
  $region16: #{conv_layer_forward.2} parent=0 // pred_region
    _
  $region17: #{conv_layer_forward.2} parent=0 // pred_fallthru
    _
  // Predicated region
  $region18: #{conv_layer_forward.2} parent=0 // pred_check
    _
  $region19: #{conv_layer_forward.2} parent=0 // pred_check_branch
    %214 = sbr.rel (0) target = $region21
  $region20: #{conv_layer_forward.2} parent=0 // pred_region
    _
  $region21: #{conv_layer_forward.2} parent=0 // pred_fallthru
    _
  // Predicated region
  $region22: #{conv_layer_forward.2} parent=0 // pred_check
    _
  $region23: #{conv_layer_forward.2} parent=0 // pred_check_branch
    %216 = sbr.rel (0) target = $region25
  $region24: #{conv_layer_forward.2} parent=0 // pred_region
    _
  $region25: #{conv_layer_forward.2} parent=0 // pred_fallthru
    _

// kernel: conv_layer_forward.3
$region0: #{conv_layer_forward.3}
  #allocation0 [shape = 'u32[]', space=smem, size = 0x4, offset = 0x4, fixed_abs, tag = 'smem constant byte address 0x4 - core index']
  #allocation1 [shape = 'u32[144,128]{1,0:T(1,128)}', space=vmem, size = 0x12000, scoped, tag = 'internal scratch']
  %s0 = inlined_call_operand.vmem [shape: f32[32,128], index: 0, kind: input, shape index: {}, may-alias: {0,3}]
  %s1 = inlined_call_operand.vmem [shape: f32[1,128], index: 1, kind: input, shape index: {}]
  %s2 = inlined_call_operand.vmem [shape: f32[1,128], index: 2, kind: input, shape index: {}]
  %s3 = inlined_call_operand.vmem [shape: f32[32,128], index: 3, kind: output, shape index: {}, may-alias: {0,3}]
  %s4 = sld [smem:[#allocation0]]
  $region22: #{conv_layer_forward.3} parent=0
    _
  %s6 = ssub.s32 1, %s4
  %s7 = scalar_select 0, %s6, %s4
  // Predicated region
  $region2: #{conv_layer_forward.3} parent=0 // pred_check
    _
  $region3: #{conv_layer_forward.3} parent=0 // pred_check_branch
    %9 = sbr.rel (0) target = $region5
  $region4: #{conv_layer_forward.3} parent=0 // pred_region
    _
  $region5: #{conv_layer_forward.3} parent=0 // pred_fallthru
    _
  // Predicated region
  $region6: #{conv_layer_forward.3} parent=0 // pred_check
    _
  $region7: #{conv_layer_forward.3} parent=0 // pred_check_branch
    %11 = sbr.rel (0) target = $region9
  $region8: #{conv_layer_forward.3} parent=0 // pred_region
    _
  $region9: #{conv_layer_forward.3} parent=0 // pred_fallthru
    _
  // Predicated region
  $region10: #{conv_layer_forward.3} parent=0 // pred_check
    _
  $region11: #{conv_layer_forward.3} parent=0 // pred_check_branch
    %13 = sbr.rel (0) target = $region13
  $region12: #{conv_layer_forward.3} parent=0 // pred_region
    _
  $region13: #{conv_layer_forward.3} parent=0 // pred_fallthru
    _
  %v14 = vld [vmem:[%s0] sm:$0xff]
  %v15 = vld [vmem:[%s0 + $0x8] sm:$0xff]
  %v16 = vld [vmem:[%s0 + $0x10] sm:$0xff]
  %v17 = vld [vmem:[%s0 + $0x18] sm:$0xff]
  %v18 = vld [vmem:[%s1] sm:$0x1]
  %v20 = vlaneseq
  %v21 = vshrl.u32 %v20, 7
  %v22 = vsub.s32 0, %v21
  %v23 = vrot.slane %v18, %v22
  %v25 = vmul.f32 %v14, %v23
  %v26 = vmul.f32 %v15, %v23
  %v27 = vmul.f32 %v16, %v23
  %v28 = vmul.f32 %v17, %v23
  %v29 = vld [vmem:[%s2] sm:$0x1]
  %v31 = vlaneseq
  %v32 = vshrl.u32 %v31, 7
  %v33 = vsub.s32 0, %v32
  %v34 = vrot.slane %v29, %v33
  %v36 = vadd.f32 %v25, %v34
  %v37 = vadd.f32 %v26, %v34
  %v38 = vadd.f32 %v27, %v34
  %v39 = vadd.f32 %v28, %v34
  %v40 = vmin.f32 %v36, 0.0
  %v41 = vmin.f32 %v37, 0.0
  %v42 = vmin.f32 %v38, 0.0
  %v43 = vmin.f32 %v39, 0.0
  %v44 = vmul.f32 %v40, 1.442695
  %v45 = vpow.pop %v44
  %v46 = vmul.f32 %v41, 1.442695
  %v47 = vpow.pop %v46
  %v48 = vmul.f32 %v42, 1.442695
  %v49 = vpow.pop %v48
  %v50 = vmul.f32 %v43, 1.442695
  %v51 = vpow.pop %v50
  %v52 = vsub.f32 %v45, 1.0
  %v53 = vsub.f32 %v47, 1.0
  %v54 = vsub.f32 %v49, 1.0
  %v55 = vsub.f32 %v51, 1.0
  %vm56 = vcmp.gt.f32.partialorder %v36, 0.0
  %vm57 = vcmp.gt.f32.partialorder %v37, 0.0
  %vm58 = vcmp.gt.f32.partialorder %v38, 0.0
  %vm59 = vcmp.gt.f32.partialorder %v39, 0.0
  %v60 = vsel %vm56, %v36, %v52
  %v61 = vsel %vm57, %v37, %v53
  %v62 = vsel %vm58, %v38, %v54
  %v63 = vsel %vm59, %v39, %v55
  %64 = vst [vmem:[%s3] sm:$0xff] %v60
  %65 = vst [vmem:[%s3 + $0x8] sm:$0xff] %v61
  %66 = vst [vmem:[%s3 + $0x10] sm:$0xff] %v62
  %67 = vst [vmem:[%s3 + $0x18] sm:$0xff] %v63
  // Predicated region
  $region14: #{conv_layer_forward.3} parent=0 // pred_check
    _
  $region15: #{conv_layer_forward.3} parent=0 // pred_check_branch
    %69 = sbr.rel (0) target = $region17
  $region16: #{conv_layer_forward.3} parent=0 // pred_region
    _
  $region17: #{conv_layer_forward.3} parent=0 // pred_fallthru
    _
  // Predicated region
  $region18: #{conv_layer_forward.3} parent=0 // pred_check
    _
  $region19: #{conv_layer_forward.3} parent=0 // pred_check_branch
    %71 = sbr.rel (0) target = $region21
  $region20: #{conv_layer_forward.3} parent=0 // pred_region
    _
  $region21: #{conv_layer_forward.3} parent=0 // pred_fallthru
    _

</llo_original>
